<compile_context>
chip_gen: v5e
topology: v5e:2x2
jax: 0.10.0
libtpu: 0.0.40
codegen_flags: <defaults>
</compile_context>

<pallas_src>
import jax
import jax.numpy as jnp
from jax.experimental import pallas as pl
from jax.experimental.pallas import tpu as pltpu


def _round_up(x, m):
    return ((x + m - 1) // m) * m


# ---------------------------------------------------------------------------
# Kernels
# ---------------------------------------------------------------------------
def _linear_kernel_f32(x_ref, wt_ref, b_ref, o_ref):
    """o = x @ W^T + b, accumulating directly into the resident f32 o_ref."""
    # x_ref: (tm, tk)  wt_ref: (tk, tn)  b_ref: (1, tn)  o_ref: (tm, tn) f32
    k = pl.program_id(2)
    contrib = jnp.dot(x_ref[...], wt_ref[...],
                      preferred_element_type=jnp.float32)

    @pl.when(k == 0)
    def _():
        o_ref[...] = contrib + b_ref[...]

    @pl.when(k != 0)
    def _():
        o_ref[...] += contrib


def _linear_kernel_acc(x_ref, wt_ref, b_ref, o_ref, acc_ref):
    """Same contraction, with an f32 scratch accumulator for non-f32 outputs."""
    k = pl.program_id(2)

    @pl.when(k == 0)
    def _():
        acc_ref[...] = jnp.zeros_like(acc_ref)

    acc_ref[...] += jnp.dot(x_ref[...], wt_ref[...],
                            preferred_element_type=jnp.float32)

    @pl.when(k == pl.num_programs(2) - 1)
    def _():
        o_ref[...] = (acc_ref[...] + b_ref[...]).astype(o_ref.dtype)


# ---------------------------------------------------------------------------
# Chip-aware tile selection
# ---------------------------------------------------------------------------
def _vmem_capacity_bytes():
    try:
        info = pltpu.get_tpu_info()
        cap = getattr(info, "vmem_capacity_bytes", None)
        if cap:
            return int(cap)
    except Exception:
        pass
    return 64 << 20  # conservative default (v7x per-TensorCore)


def _select_tiles(B, Np, Kp128, out_is_f32):
    vmem_cap = _vmem_capacity_bytes()
    big_vmem = vmem_cap >= (100 << 20)                 # v5e / v6e (128 MiB)
    budget = (96 << 20) if big_vmem else (48 << 20)    # soft VMEM budget

    # Small-weight fast path: whole padded W^T stays VMEM-resident, and the
    # K grid axis collapses to one step.
    if Np * Kp128 * 4 <= (4 << 20):
        tn, tk = Np, Kp128
    else:
        tn = min(512, Np)
        tk = min(2048 if big_vmem else 1024, Kp128)

    tm = min(512, _round_up(B, 8))

    # Keep both v7x TensorCores busy: ensure a "parallel" axis has >=2 blocks.
    if B >= 16 and pl.cdiv(B, tm) == 1 and pl.cdiv(Np, tn) == 1:
        tm = _round_up(pl.cdiv(B, 2), 8)

    def footprint(tm_, tn_, tk_):
        fp = 2 * 4 * (tm_ * tk_ + tk_ * tn_ + tn_)    # double-buffered inputs
        fp += 2 * 4 * tm_ * tn_                       # double-buffered output
        if not out_is_f32:
            fp += 4 * tm_ * tn_                       # scratch accumulator
        return fp

    # Safety net: shrink tiles until they fit the per-chip budget.
    while footprint(tm, tn, tk) > budget:
        if tk > 512:
            tk = _round_up(tk // 2, 128)
        elif tm > 256:
            tm = _round_up(tm // 2, 8)
        elif tn > 256:
            tn = _round_up(tn // 2, 128)
        else:
            break

    vmem_limit = min(int(footprint(tm, tn, tk) * 1.5) + (4 << 20), budget)
    vmem_limit = max(vmem_limit, 32 << 20)
    return tm, tn, tk, vmem_limit


# ---------------------------------------------------------------------------
# Module wrapper (parameter prep hoisted out of the per-call forward)
# ---------------------------------------------------------------------------
class PallasLinear:
    """Pallas-TPU equivalent of `nn.Linear(dim, num_class)` forward."""

    def __init__(self, weight, bias):
        # weight: (num_class, dim), bias: (num_class,)
        self.num_class, self.dim = weight.shape
        self.Np = _round_up(self.num_class, 128)       # lane-dense N
        self.Kp128 = _round_up(self.dim, 128)

        # One-time parameter prep: cache W^T zero-padded to (Kp128, Np) so
        # the MXU sees a native (tk, tn) RHS; bias as a padded (1, Np) row.
        wt = jnp.transpose(weight)
        self.wt = jnp.pad(wt, ((0, self.Kp128 - self.dim),
                               (0, self.Np - self.num_class)))
        self.b2d = jnp.pad(bias, (0, self.Np - self.num_class)
                           ).reshape(1, self.Np).astype(jnp.float32)

    def __call__(self, x):
        B, dim = x.shape
        assert dim == self.dim, "input feature dim mismatch"
        out_dtype = x.dtype
        out_is_f32 = out_dtype == jnp.float32

        tm, tn, tk, vmem_limit = _select_tiles(B, self.Np, self.Kp128,
                                               out_is_f32)

        # K must be zero-padded to a multiple of tk (edge blocks are NOT
        # guaranteed zero and would corrupt the reduction).  M needs no
        # padding: rows past B only feed output rows masked at writeback.
        Kp = _round_up(self.dim, tk)
        x_p = x if Kp == dim else jnp.pad(x, ((0, 0), (0, Kp - dim)))
        wt = self.wt if Kp == self.Kp128 else jnp.pad(
            self.wt, ((0, Kp - self.Kp128), (0, 0)))

        grid = (pl.cdiv(B, tm), pl.cdiv(self.Np, tn), Kp // tk)

        in_specs = [
            pl.BlockSpec((tm, tk), lambda i, j, k: (i, k)),   # x tile
            pl.BlockSpec((tk, tn), lambda i, j, k: (k, j)),   # cached W^T tile
            pl.BlockSpec((1, tn), lambda i, j, k: (0, j)),    # bias tile
        ]
        out_spec = pl.BlockSpec((tm, tn), lambda i, j, k: (i, j))

        kernel = _linear_kernel_f32 if out_is_f32 else _linear_kernel_acc
        scratch = [] if out_is_f32 else [pltpu.VMEM((tm, tn), jnp.float32)]

        out_p = pl.pallas_call(
            kernel,
            out_shape=jax.ShapeDtypeStruct((B, self.Np), out_dtype),
            grid_spec=pltpu.PrefetchScalarGridSpec(
                num_scalar_prefetch=0,
                grid=grid,
                in_specs=in_specs,
                out_specs=out_spec,
                scratch_shapes=scratch,
            ),
            compiler_params=pltpu.CompilerParams(
                dimension_semantics=("parallel", "parallel", "arbitrary"),
                vmem_limit_bytes=vmem_limit),
            cost_estimate=pl.CostEstimate(
                flops=2 * B * self.dim * self.num_class,
                bytes_accessed=4 * (B * self.dim + self.dim * self.num_class
                                    + B * self.num_class),
                transcendentals=0),
        )(x_p, wt, self.b2d)

        if self.Np == self.num_class:
            return out_p
        return out_p[:, :self.num_class]


if __name__ == "__main__":
    # Small shapes consistent with the module: dim=32 features, num_class=16.
    B, dim, num_class = 8, 32, 16

    key = jax.random.PRNGKey(0)
    kx, kw, kb = jax.random.split(key, 3)

    x = jax.random.normal(kx, (B, dim), dtype=jnp.float32)
    # Deterministic init (mimics nn.Linear uniform(-1/sqrt(dim), 1/sqrt(dim)))
    bound = 1.0 / (dim ** 0.5)
    weight = jax.random.uniform(kw, (num_class, dim), jnp.float32, -bound, bound)
    bias = jax.random.uniform(kb, (num_class,), jnp.float32, -bound, bound)

    model = PallasLinear(weight, bias)            # one-time W^T / bias prep
    out = jax.block_until_ready(model(x))

    # Reference check against plain JAX
    ref = x @ weight.T + bias
    assert out.shape == (B, num_class)
    assert jnp.allclose(out, ref, atol=1e-5, rtol=1e-5)

    print("KERNEL_OK")
</pallas_src>

<mosaic_0001>
module attributes {stable_mosaic.version = 11 : i64} {
  func.func @_linear_kernel_f32(%arg0: i32, %arg1: i32, %arg2: i32, %arg3: memref<8x128xf32, #tpu.memory_space<vmem>>, %arg4: memref<128x128xf32, #tpu.memory_space<vmem>>, %arg5: memref<1x128xf32, #tpu.memory_space<vmem>>, %arg6: memref<8x128xf32, #tpu.memory_space<vmem>>) attributes {dimension_semantics = [#tpu.dimension_semantics<parallel>, #tpu.dimension_semantics<parallel>, #tpu.dimension_semantics<arbitrary>], iteration_bounds = array<i64: 1, 1, 1>, scalar_prefetch = 0 : i64, scratch_operands = 0 : i64, tpu.core_type = #tpu.core_type<tc>, window_params = [{transform_indices = @transform_0, window_bounds = array<i64: 8, 128>}, {transform_indices = @transform_1, window_bounds = array<i64: 128, 128>}, {transform_indices = @transform_2, window_bounds = array<i64: 1, 128>}, {transform_indices = @transform_3, window_bounds = array<i64: 8, 128>}]} {
    %c0 = arith.constant 0 : index
    %c0_0 = arith.constant 0 : index
    %0 = vector.load %arg3[%c0, %c0_0] : memref<8x128xf32, #tpu.memory_space<vmem>>, vector<8x128xf32>
    %c0_1 = arith.constant 0 : index
    %c0_2 = arith.constant 0 : index
    %1 = vector.load %arg4[%c0_1, %c0_2] : memref<128x128xf32, #tpu.memory_space<vmem>>, vector<128x128xf32>
    %cst = arith.constant dense<0.000000e+00> : vector<8x128xf32>
    %2 = tpu.matmul %0, %1, %cst {dimension_numbers = #tpu.dot_dimension_numbers<[1], [0], [0], [1], [0, 0, 1, 1], [], []>} : vector<8x128xf32>, vector<128x128xf32>, vector<8x128xf32> -> vector<8x128xf32>
    %c0_i32 = arith.constant 0 : i32
    %3 = arith.cmpi eq, %arg2, %c0_i32 : i32
    %4 = arith.extui %3 : i1 to i32
    %c0_i32_3 = arith.constant 0 : i32
    %5 = arith.cmpi ne, %4, %c0_i32_3 : i32
    scf.if %5 {
      %c0_6 = arith.constant 0 : index
      %c0_7 = arith.constant 0 : index
      %9 = vector.load %arg5[%c0_6, %c0_7] : memref<1x128xf32, #tpu.memory_space<vmem>>, vector<1x128xf32>
      %10 = vector.broadcast %9 : vector<1x128xf32> to vector<8x128xf32>
      %11 = arith.addf %2, %10 : vector<8x128xf32>
      %c0_8 = arith.constant 0 : index
      %c0_9 = arith.constant 0 : index
      %12 = vector.load %arg6[%c0_8, %c0_9] : memref<8x128xf32, #tpu.memory_space<vmem>>, vector<8x128xf32>
      tpu.vector_store %arg6[%c0_8, %c0_9], %11 {strides = array<i32>} : memref<8x128xf32, #tpu.memory_space<vmem>>, vector<8x128xf32>,
    } else {
    }
    %c0_i32_4 = arith.constant 0 : i32
    %6 = arith.cmpi ne, %arg2, %c0_i32_4 : i32
    %7 = arith.extui %6 : i1 to i32
    %c0_i32_5 = arith.constant 0 : i32
    %8 = arith.cmpi ne, %7, %c0_i32_5 : i32
    scf.if %8 {
      %c0_6 = arith.constant 0 : index
      %c0_7 = arith.constant 0 : index
      %9 = vector.load %arg6[%c0_6, %c0_7] : memref<8x128xf32, #tpu.memory_space<vmem>>, vector<8x128xf32>
      %10 = arith.addf %9, %2 : vector<8x128xf32>
      %c0_8 = arith.constant 0 : index
      %c0_9 = arith.constant 0 : index
      %11 = vector.load %arg6[%c0_8, %c0_9] : memref<8x128xf32, #tpu.memory_space<vmem>>, vector<8x128xf32>
      tpu.vector_store %arg6[%c0_8, %c0_9], %10 {strides = array<i32>} : memref<8x128xf32, #tpu.memory_space<vmem>>, vector<8x128xf32>,
    } else {
    }
    return
  }
  func.func @transform_0(%arg0: i32, %arg1: i32, %arg2: i32) -> (i32, i32) {
    %c0_i32 = arith.constant 0 : i32
    return %arg0, %arg2 : i32, i32
  }
  func.func @transform_1(%arg0: i32, %arg1: i32, %arg2: i32) -> (i32, i32) {
    %c0_i32 = arith.constant 0 : i32
    return %arg2, %arg1 : i32, i32
  }
  func.func @transform_2(%arg0: i32, %arg1: i32, %arg2: i32) -> (i32, i32) {
    %c0_i32 = arith.constant 0 : i32
    %c0_i32_0 = arith.constant 0 : i32
    return %c0_i32, %arg1 : i32, i32
  }
  func.func @transform_3(%arg0: i32, %arg1: i32, %arg2: i32) -> (i32, i32) {
    %c0_i32 = arith.constant 0 : i32
    return %arg0, %arg1 : i32, i32
  }
}

</mosaic_0001>

<llo_original>
// kernel: tpu_custom_call.1
$region0: #{tpu_custom_call.1}
  #allocation0 [shape = 'u32[]', space=smem, size = 0x4, offset = 0x4, fixed_abs, tag = 'smem constant byte address 0x4 - core index']
  #allocation1 [shape = 'u32[72,128]{1,0:T(1,128)}', space=vmem, size = 0x9000, scoped, tag = 'internal scratch']
  %s0 = inlined_call_operand.hbm [shape: f32[8,128], index: 0, kind: input, shape index: {}]
  %s1 = inlined_call_operand.hbm [shape: f32[128,128], index: 1, kind: input, shape index: {}]
  %s2 = inlined_call_operand.vmem [shape: f32[1,128], index: 2, kind: input, shape index: {}]
  %s3 = inlined_call_operand.hbm [shape: f32[8,128], index: 3, kind: output, shape index: {}]
  %s4 = sld [smem:[#allocation0]]
  $region38: #{tpu_custom_call.1} parent=0
    _
  %s6 = ssub.s32 1, %s4
  %s7 = scalar_select 0, %s6, %s4
  $region1: #{tpu_custom_call.1} parent=0
    #allocation2 [shape = 'u8[4096]{0}', space=vmem, size = 0x1000, scoped, tag = 'input window, operand 0, single buffered']
    #allocation3 [shape = 's32[1]{0}', space=sflag, size = 0x4, scoped, tag = 'scoped memory for tpu_custom_call.1']
    #allocation4 [shape = 's32[1]{0}', space=sflag, size = 0x4, scoped, tag = 'scoped memory for tpu_custom_call.1']
    #allocation5 [shape = 'u8[65536]{0}', space=vmem, size = 0x10000, scoped, tag = 'input window, operand 1, single buffered']
    #allocation6 [shape = 's32[1]{0}', space=sflag, size = 0x4, scoped, tag = 'scoped memory for tpu_custom_call.1']
    #allocation7 [shape = 'u8[4096]{0}', space=vmem, size = 0x1000, scoped, tag = 'output window, operand 0, single buffered']
    %8 = vsyncpa [#allocation3], 0
    %9 = vsyncpa [#allocation6], 0
    %10 = vsyncpa [#allocation4], 0
    // Predicated region
    $region2: #{tpu_custom_call.1} parent=1 // pred_check
      _
    $region3: #{tpu_custom_call.1} parent=1 // pred_check_branch
      %12 = sbr.rel (0) target = $region5
    $region4: #{tpu_custom_call.1} parent=1 // pred_region
      %14 = vsyncadd [#allocation3], 0
      %s16 = sshll.u32 %s0, 4
      %s17 = int_to_ptr.hbm [resolvable:$true] %s16
      %s18 = sshll.u32 [#allocation2], 4
      %s19 = int_to_ptr.vmem [resolvable:$true] %s18
      %21 = dma.hbm_to_vmem [thread:$0]  %s17, 128, %s19, [#allocation3]
    $region5: #{tpu_custom_call.1} parent=1 // pred_fallthru
      _
    // Predicated region
    $region6: #{tpu_custom_call.1} parent=1 // pred_check
      _
    $region7: #{tpu_custom_call.1} parent=1 // pred_check_branch
      %23 = sbr.rel (0) target = $region9
    $region8: #{tpu_custom_call.1} parent=1 // pred_region
      %25 = vsyncadd [#allocation6], 0
      %s26 = sshll.u32 %s1, 4
      %s27 = int_to_ptr.hbm [resolvable:$true] %s26
      %s28 = sshll.u32 [#allocation5], 4
      %s29 = int_to_ptr.vmem [resolvable:$true] %s28
      %34 = dma.hbm_to_vmem [thread:$0]  %s27, 2048, %s29, [#allocation6], 128, 128, 8
    $region9: #{tpu_custom_call.1} parent=1 // pred_fallthru
      _
    // Predicated region
    $region10: #{tpu_custom_call.1} parent=1 // pred_check
      _
    $region11: #{tpu_custom_call.1} parent=1 // pred_check_branch
      %36 = sbr.rel (0) target = $region13
    $region12: #{tpu_custom_call.1} parent=1 // pred_region
      _
    $region13: #{tpu_custom_call.1} parent=1 // pred_fallthru
      _
    // Predicated region
    $region14: #{tpu_custom_call.1} parent=1 // pred_check
      _
    $region15: #{tpu_custom_call.1} parent=1 // pred_check_branch
      %38 = sbr.rel (0) target = $region17
    $region16: #{tpu_custom_call.1} parent=1 // pred_region
      %40 = dma.done [#allocation3], 128
    $region17: #{tpu_custom_call.1} parent=1 // pred_fallthru
      _
    // Predicated region
    $region18: #{tpu_custom_call.1} parent=1 // pred_check
      _
    $region19: #{tpu_custom_call.1} parent=1 // pred_check_branch
      %42 = sbr.rel (0) target = $region21
    $region20: #{tpu_custom_call.1} parent=1 // pred_region
      %44 = dma.done [#allocation6], 2048
    $region21: #{tpu_custom_call.1} parent=1 // pred_fallthru
      _
    %v45 = vld [vmem:[#allocation2] sm:$0xff]
    %v46 = vld [vmem:[#allocation5] sm:$0xff]
    %v47 = vld [vmem:[#allocation5 + $0x8] sm:$0xff]
    %v48 = vld [vmem:[#allocation5 + $0x10] sm:$0xff]
    %v49 = vld [vmem:[#allocation5 + $0x18] sm:$0xff]
    %v50 = vld [vmem:[#allocation5 + $0x20] sm:$0xff]
    %v51 = vld [vmem:[#allocation5 + $0x28] sm:$0xff]
    %v52 = vld [vmem:[#allocation5 + $0x30] sm:$0xff]
    %v53 = vld [vmem:[#allocation5 + $0x38] sm:$0xff]
    %v54 = vld [vmem:[#allocation5 + $0x40] sm:$0xff]
    %v55 = vld [vmem:[#allocation5 + $0x48] sm:$0xff]
    %v56 = vld [vmem:[#allocation5 + $0x50] sm:$0xff]
    %v57 = vld [vmem:[#allocation5 + $0x58] sm:$0xff]
    %v58 = vld [vmem:[#allocation5 + $0x60] sm:$0xff]
    %v59 = vld [vmem:[#allocation5 + $0x68] sm:$0xff]
    %v60 = vld [vmem:[#allocation5 + $0x70] sm:$0xff]
    %v61 = vld [vmem:[#allocation5 + $0x78] sm:$0xff]
    %62 = vmatpush.msra.mxu0 %v61
    %63 = vmatpush.msra.mxu0 %v60
    %64 = vmatpush.msra.mxu0 %v59
    %65 = vmatpush.msra.mxu0 %v58
    %66 = vmatpush.msra.mxu0 %v57
    %67 = vmatpush.msra.mxu0 %v56
    %68 = vmatpush.msra.mxu0 %v55
    %69 = vmatpush.msra.mxu0 %v54
    %70 = vmatpush.msra.mxu0 %v53
    %71 = vmatpush.msra.mxu0 %v52
    %72 = vmatpush.msra.mxu0 %v51
    %73 = vmatpush.msra.mxu0 %v50
    %74 = vmatpush.msra.mxu0 %v49
    %75 = vmatpush.msra.mxu0 %v48
    %76 = vmatpush.msra.mxu0 %v47
    %77 = vmatpush.msra.mxu0 %v46
    %78 = vmatmul.f32.gmra.mxu0 %v45
    %v79 = vpop.f32.mrf.mxu0
    %v80 = vadd.f32 0.0, %v79
    %81 = vdwg.mxu0
    %p82 = scmp.eq.s32.totalorder 0, 0
    // Predicated region
    $region22: #{tpu_custom_call.1} parent=1 // pred_check
      %p83 = pneg %p82
    $region23: #{tpu_custom_call.1} parent=1 // pred_check_branch
      %85 = sbr.rel (%p83) target = $region25
    $region24: #{tpu_custom_call.1} parent=1 // pred_region
      %v86 = vld [vmem:[%s2] sm:$0x1]
      %v88 = vperm.slane %v86, 0
      %v90 = vadd.f32 %v80, %v88
      %91 = vst [vmem:[#allocation7] sm:$0xff] %v90
    $region25: #{tpu_custom_call.1} parent=1 // pred_fallthru
      _
    %p92 = scmp.ne.s32.totalorder 0, 0
    // Predicated region
    $region26: #{tpu_custom_call.1} parent=1 // pred_check
      %p93 = pneg %p92
    $region27: #{tpu_custom_call.1} parent=1 // pred_check_branch
      %95 = sbr.rel (%p93) target = $region29
    $region28: #{tpu_custom_call.1} parent=1 // pred_region
      %v96 = vld [vmem:[#allocation7] sm:$0xff]
      %v97 = vadd.f32 %v96, %v80
      %98 = vst [vmem:[#allocation7] sm:$0xff] %v97
    $region29: #{tpu_custom_call.1} parent=1 // pred_fallthru
      _
    // Predicated region
    $region30: #{tpu_custom_call.1} parent=1 // pred_check
      _
    $region31: #{tpu_custom_call.1} parent=1 // pred_check_branch
      %100 = sbr.rel (0) target = $region33
    $region32: #{tpu_custom_call.1} parent=1 // pred_region
      %102 = vsyncadd [#allocation4], 0
      %s104 = sshll.u32 [#allocation7], 4
      %s105 = int_to_ptr.vmem [resolvable:$true] %s104
      %s106 = sshll.u32 %s3, 4
      %s107 = int_to_ptr.hbm [resolvable:$true] %s106
      %109 = dma.vmem_to_hbm [thread:$0]  %s105, 128, %s107, [#allocation4]
    $region33: #{tpu_custom_call.1} parent=1 // pred_fallthru
      _
    // Predicated region
    $region34: #{tpu_custom_call.1} parent=1 // pred_check
      _
    $region35: #{tpu_custom_call.1} parent=1 // pred_check_branch
      %111 = sbr.rel (0) target = $region37
    $region36: #{tpu_custom_call.1} parent=1 // pred_region
      %113 = dma.done [#allocation4], 128
    $region37: #{tpu_custom_call.1} parent=1 // pred_fallthru
      _
    %114 = vsyncpa [#allocation3], 1
    %115 = vsyncpa [#allocation6], 1
    %116 = vsyncpa [#allocation4], 1

</llo_original>
